<compile_context>
chip_gen: v6e
topology: v6e:2x2x1
jax: 0.10.0
libtpu: 0.0.40
codegen_flags: <defaults>
</compile_context>

<pallas_src>
import functools

import jax
import jax.numpy as jnp
from jax import lax
from jax.experimental import pallas as pl
from jax.experimental.pallas import tpu as pltpu

EPS = 1e-5
NEG_SLOPE = 0.01


def _round_up(x, m):
    return ((x + m - 1) // m) * m


def _conv_in_lrelu_kernel(x_ref, w_ref, g_ref, b_ref, o_ref, *, n_valid, m_rows):
    """One (batch, c_out-block) grid step.

    x_ref: (1, m_pad, k_pad)  bf16  exact im2col patches (one row per output pixel)
    w_ref: (k_pad, c_blk)     bf16  folded conv weight (K = kh*kw*C_in, zero-padded)
    g_ref: (1, c_blk)         f32   gamma
    b_ref: (1, c_blk)         f32   beta
    o_ref: (1, m_pad, c_blk)  bf16  InstanceNorm + LeakyReLU output (lane dense)
    """
    # Entire conv for this (image, c_out-block) is ONE MXU matmul: taps and C_in are
    # folded into the contraction dim, f32 accumulation on the MXU.
    acc = jnp.dot(x_ref[0], w_ref[...], preferred_element_type=jnp.float32)

    # NOTE: dropout_op=None in this configuration (nnU-Net default); no dropout.

    # InstanceNorm2d statistics in f32, two passes (mean, then centered variance).
    # Padded rows of the im2col are exact zeros -> contribute 0 to the mean sum; they
    # are masked out of the variance with a free iota compare (only if padding exists).
    m_pad = acc.shape[0]
    inv_n = 1.0 / n_valid
    mean = jnp.sum(acc, axis=0, keepdims=True) * inv_n           # (1, c_blk)
    cen = acc - mean
    if m_rows != m_pad:
        row_ok = lax.broadcasted_iota(jnp.int32, (m_pad, 1), 0) < m_rows
        cen = jnp.where(row_ok, cen, 0.0)
    var = jnp.maximum(jnp.sum(cen * cen, axis=0, keepdims=True) * inv_n, 0.0)
    inv_std = lax.rsqrt(var + EPS)

    # Fold norm + affine into a single per-channel scale/shift FMA, then LeakyReLU.
    scale = g_ref[...] * inv_std
    shift = b_ref[...] - mean * scale
    y = acc * scale + shift
    y = jnp.where(y >= 0, y, NEG_SLOPE * y)

    o_ref[0] = y.astype(o_ref.dtype)


@functools.partial(jax.jit, static_argnames=("stride",))
def conv_dropout_norm_relu(x_nchw, weight_oihw, gamma, beta, stride=(1, 1)):
    """Forward pass of ConvDropoutNormReLU.

    x_nchw:      (N, C_in, H, W)       float32
    weight_oihw: (C_out, C_in, KH, KW) float32 (PyTorch Conv2d layout, no bias)
    gamma, beta: (C_out,)              float32 (InstanceNorm affine params)
    returns:     (N, C_out, H_out, W_out) float32
    """
    if isinstance(stride, int):
        stride = (stride, stride)
    n, c_in, h, w = x_nchw.shape
    c_out, _, kh, kw = weight_oihw.shape
    sh, sw = stride
    # NOTE: symmetric (k-1)//2 padding matches PyTorch only for odd kernel sizes.
    ph, pw = (kh - 1) // 2, (kw - 1) // 2
    h_out = (h + 2 * ph - kh) // sh + 1
    w_out = (w + 2 * pw - kw) // sw + 1

    m = h_out * w_out                       # true number of output positions
    m_pad = _round_up(m, 8)                 # sublane alignment of the row dim
    k_dim = kh * kw * c_in                  # folded MXU contraction dim
    k_pad = _round_up(k_dim, 16)            # bf16 sublane packing of K
    c_blk = 256 if c_out >= 256 else 128    # 256-wide RHS fills v6e/v7x MXU on deep layers
    c_pad = _round_up(c_out, c_blk)
    n_cb = c_pad // c_blk

    # ---- wrapper-side layout glue (cheap XLA pad / slice / concat) -------------
    # Inputs and weights cast to bf16 (intentional accuracy tradeoff; IN follows).
    x_nhwc = jnp.transpose(x_nchw, (0, 2, 3, 1)).astype(jnp.bfloat16)
    x_p = jnp.pad(x_nhwc, ((0, 0), (ph, ph), (pw, pw), (0, 0)))
    # Exact im2col over the TRUE output positions only: the conv stride is applied
    # here, so the kernel never computes/writes discarded stride-1 rows and needs
    # no validity-mask input. Tap order: ih-major, iw, then C_in (matches weight).
    taps = []
    for ih in range(kh):
        for iw in range(kw):
            taps.append(x_p[:, ih:ih + (h_out - 1) * sh + 1:sh,
                            iw:iw + (w_out - 1) * sw + 1:sw, :])
    x_col = jnp.concatenate(taps, axis=-1).reshape(n, m, k_dim)
    x_col = jnp.pad(x_col, ((0, 0), (0, m_pad - m), (0, k_pad - k_dim)))

    # Conv weight folded to (kh*kw*C_in, C_out), zero-padded -> lane-dense MXU RHS.
    w_k = jnp.transpose(weight_oihw, (2, 3, 1, 0)).reshape(k_dim, c_out)
    w_k = jnp.pad(w_k, ((0, k_pad - k_dim), (0, c_pad - c_out))).astype(jnp.bfloat16)

    gamma2 = jnp.pad(gamma.astype(jnp.float32), (0, c_pad - c_out)).reshape(1, c_pad)
    beta2 = jnp.pad(beta.astype(jnp.float32), (0, c_pad - c_out)).reshape(1, c_pad)

    # Derived VMEM budget: double-buffered blocks + f32 conv-result spill + margin,
    # capped to stay inside v7x's 64 MiB physical VMEM (raise on 128 MiB parts if
    # larger row blocks are wanted).
    blk_bytes = (m_pad * k_pad * 2 + k_pad * c_blk * 2
                 + 2 * c_blk * 4 + m_pad * c_blk * 2)
    vmem_bytes = int(min(max(2 * blk_bytes + m_pad * c_blk * 4 + (4 << 20), 32 << 20),
                         56 << 20))

    kernel = functools.partial(_conv_in_lrelu_kernel, n_valid=float(m), m_rows=m)

    out = pl.pallas_call(
        kernel,
        out_shape=jax.ShapeDtypeStruct((n, m_pad, c_pad), jnp.bfloat16),
        grid_spec=pltpu.PrefetchScalarGridSpec(
            num_scalar_prefetch=0,
            grid=(n, n_cb),
            in_specs=[
                pl.BlockSpec((1, m_pad, k_pad), lambda b, cb: (b, 0, 0)),
                pl.BlockSpec((k_pad, c_blk), lambda b, cb: (0, cb)),
                pl.BlockSpec((1, c_blk), lambda b, cb: (0, cb)),
                pl.BlockSpec((1, c_blk), lambda b, cb: (0, cb)),
            ],
            out_specs=pl.BlockSpec((1, m_pad, c_blk), lambda b, cb: (b, 0, cb)),
        ),
        compiler_params=pltpu.CompilerParams(
            dimension_semantics=("parallel", "parallel"),
            vmem_limit_bytes=vmem_bytes),
    )(x_col, w_k, gamma2, beta2)

    # Drop row / channel padding, un-flatten, return NCHW like the PyTorch module
    # (downstream layers could consume NHWC directly and skip this transpose).
    # TODO(synk): for realistic nnU-Net slab sizes (m ~ 1e5+) add a row-tile grid
    # axis with partial-sum (two-pass) InstanceNorm so one image never has to fit
    # in VMEM and v7x's second TensorCore gets work at N=1.
    out = out[:, :m, :c_out].astype(jnp.float32).reshape(n, h_out, w_out, c_out)
    return jnp.transpose(out, (0, 3, 1, 2))


def _reference(x_nchw, weight_oihw, gamma, beta, stride=(1, 1)):
    """Pure-JAX f32 reference for validation."""
    kh, kw = weight_oihw.shape[2], weight_oihw.shape[3]
    ph, pw = (kh - 1) // 2, (kw - 1) // 2
    y = lax.conv_general_dilated(
        x_nchw, weight_oihw, window_strides=stride,
        padding=((ph, ph), (pw, pw)),
        dimension_numbers=("NCHW", "OIHW", "NCHW"),
        precision=lax.Precision.HIGHEST)
    mean = jnp.mean(y, axis=(2, 3), keepdims=True)
    var = jnp.var(y, axis=(2, 3), keepdims=True)
    y = (y - mean) * lax.rsqrt(var + EPS)
    y = y * gamma.reshape(1, -1, 1, 1) + beta.reshape(1, -1, 1, 1)
    return jnp.where(y >= 0, y, NEG_SLOPE * y)


if __name__ == "__main__":
    key = jax.random.PRNGKey(0)
    kx, kw_, kg, kb = jax.random.split(key, 4)

    N, C_IN, C_OUT, H, W, K = 2, 4, 8, 16, 16, 3
    x = jax.random.normal(kx, (N, C_IN, H, W), dtype=jnp.float32)

    # Deterministic "kaiming-ish" conv weight init; conv_bias=False.
    fan_in = C_IN * K * K
    weight = jax.random.normal(kw_, (C_OUT, C_IN, K, K), dtype=jnp.float32)
    weight = weight * (2.0 / fan_in) ** 0.5
    # Non-trivial InstanceNorm affine params to exercise the affine path.
    gamma = 1.0 + 0.1 * jax.random.normal(kg, (C_OUT,), dtype=jnp.float32)
    beta = 0.1 * jax.random.normal(kb, (C_OUT,), dtype=jnp.float32)

    PH = (K - 1) // 2
    for stride in ((1, 1), (2, 2)):          # stride-2 (downsampling conv) path too
        out = conv_dropout_norm_relu(x, weight, gamma, beta, stride=stride)
        out = jax.block_until_ready(out)
        ref = _reference(x, weight, gamma, beta, stride=stride)
        h_out = (H + 2 * PH - K) // stride[0] + 1
        w_out = (W + 2 * PH - K) // stride[1] + 1
        assert out.shape == (N, C_OUT, h_out, w_out), out.shape
        err = float(jnp.max(jnp.abs(out - ref)))
        # bf16 conv inputs/output (f32 MXU accumulation & IN stats) vs f32 reference.
        assert jnp.allclose(out, ref, rtol=3e-2, atol=3e-2), err

    print("KERNEL_OK")
</pallas_src>

<mosaic_0001>
module attributes {stable_mosaic.version = 11 : i64} {
  func.func @_conv_in_lrelu_kernel(%arg0: i32, %arg1: i32, %arg2: memref<1x256x48xbf16, #tpu.memory_space<vmem>>, %arg3: memref<48x128xbf16, #tpu.memory_space<vmem>>, %arg4: memref<1x128xf32, #tpu.memory_space<vmem>>, %arg5: memref<1x128xf32, #tpu.memory_space<vmem>>, %arg6: memref<1x256x128xbf16, #tpu.memory_space<vmem>>) attributes {dimension_semantics = [#tpu.dimension_semantics<parallel>, #tpu.dimension_semantics<parallel>], iteration_bounds = array<i64: 2, 1>, scalar_prefetch = 0 : i64, scratch_operands = 0 : i64, tpu.core_type = #tpu.core_type<tc>, window_params = [{transform_indices = @transform_0, window_bounds = array<i64: 1, 256, 48>}, {transform_indices = @transform_1, window_bounds = array<i64: 48, 128>}, {transform_indices = @transform_2, window_bounds = array<i64: 1, 128>}, {transform_indices = @transform_3, window_bounds = array<i64: 1, 128>}, {transform_indices = @transform_4, window_bounds = array<i64: 1, 256, 128>}]} {
    %c0 = arith.constant 0 : index
    %c0_0 = arith.constant 0 : index
    %c0_1 = arith.constant 0 : index
    %0 = vector.load %arg2[%c0, %c0_0, %c0_1] : memref<1x256x48xbf16, #tpu.memory_space<vmem>>, vector<1x256x48xbf16>
    %1 = vector.shape_cast %0 : vector<1x256x48xbf16> to vector<256x48xbf16>
    %c0_2 = arith.constant 0 : index
    %c0_3 = arith.constant 0 : index
    %2 = vector.load %arg3[%c0_2, %c0_3] : memref<48x128xbf16, #tpu.memory_space<vmem>>, vector<48x128xbf16>
    %cst = arith.constant dense<0.000000e+00> : vector<256x128xf32>
    %3 = tpu.matmul %1, %2, %cst {dimension_numbers = #tpu.dot_dimension_numbers<[1], [0], [0], [1], [0, 0, 1, 1], [], []>} : vector<256x48xbf16>, vector<48x128xbf16>, vector<256x128xf32> -> vector<256x128xf32>
    %cst_4 = arith.constant dense<0.000000e+00> : vector<128xf32>
    %4 = vector.multi_reduction <add>, %3, %cst_4 [0] : vector<256x128xf32> to vector<128xf32>
    %5 = vector.shape_cast %4 : vector<128xf32> to vector<1x128xf32>
    %cst_5 = arith.constant 3.906250e-03 : f32
    %6 = vector.broadcast %cst_5 : f32 to vector<1x128xf32>
    %7 = arith.mulf %5, %6 : vector<1x128xf32>
    %8 = vector.broadcast %7 : vector<1x128xf32> to vector<256x128xf32>
    %9 = arith.subf %3, %8 : vector<256x128xf32>
    %10 = arith.mulf %9, %9 : vector<256x128xf32>
    %cst_6 = arith.constant dense<0.000000e+00> : vector<128xf32>
    %11 = vector.multi_reduction <add>, %10, %cst_6 [0] : vector<256x128xf32> to vector<128xf32>
    %12 = vector.shape_cast %11 : vector<128xf32> to vector<1x128xf32>
    %cst_7 = arith.constant 3.906250e-03 : f32
    %13 = vector.broadcast %cst_7 : f32 to vector<1x128xf32>
    %14 = arith.mulf %12, %13 : vector<1x128xf32>
    %cst_8 = arith.constant 0.000000e+00 : f32
    %15 = vector.broadcast %cst_8 : f32 to vector<1x128xf32>
    %16 = arith.maximumf %14, %15 : vector<1x128xf32>
    %cst_9 = arith.constant 9.99999974E-6 : f32
    %17 = vector.broadcast %cst_9 : f32 to vector<1x128xf32>
    %18 = arith.addf %16, %17 : vector<1x128xf32>
    %19 = math.rsqrt %18 : vector<1x128xf32>
    %c0_10 = arith.constant 0 : index
    %c0_11 = arith.constant 0 : index
    %20 = vector.load %arg4[%c0_10, %c0_11] : memref<1x128xf32, #tpu.memory_space<vmem>>, vector<1x128xf32>
    %21 = arith.mulf %20, %19 : vector<1x128xf32>
    %c0_12 = arith.constant 0 : index
    %c0_13 = arith.constant 0 : index
    %22 = vector.load %arg5[%c0_12, %c0_13] : memref<1x128xf32, #tpu.memory_space<vmem>>, vector<1x128xf32>
    %23 = arith.mulf %7, %21 : vector<1x128xf32>
    %24 = arith.subf %22, %23 : vector<1x128xf32>
    %25 = vector.broadcast %21 : vector<1x128xf32> to vector<256x128xf32>
    %26 = arith.mulf %3, %25 : vector<256x128xf32>
    %27 = vector.broadcast %24 : vector<1x128xf32> to vector<256x128xf32>
    %28 = arith.addf %26, %27 : vector<256x128xf32>
    %cst_14 = arith.constant 0.000000e+00 : f32
    %29 = vector.broadcast %cst_14 : f32 to vector<256x128xf32>
    %30 = arith.cmpf oge, %28, %29 : vector<256x128xf32>
    %cst_15 = arith.constant 0.00999999977 : f32
    %31 = vector.broadcast %cst_15 : f32 to vector<256x128xf32>
    %32 = arith.mulf %31, %28 : vector<256x128xf32>
    %33 = arith.select %30, %28, %32 : vector<256x128xi1>, vector<256x128xf32>
    %34 = arith.truncf %33 : vector<256x128xf32> to vector<256x128xbf16>
    %c0_16 = arith.constant 0 : index
    %c0_17 = arith.constant 0 : index
    %c0_18 = arith.constant 0 : index
    %35 = vector.load %arg6[%c0_16, %c0_17, %c0_18] : memref<1x256x128xbf16, #tpu.memory_space<vmem>>, vector<1x256x128xbf16>
    %36 = vector.shape_cast %35 : vector<1x256x128xbf16> to vector<256x128xbf16>
    %37 = vector.shape_cast %34 : vector<256x128xbf16> to vector<1x256x128xbf16>
    tpu.vector_store %arg6[%c0_16, %c0_17, %c0_18], %37 {strides = array<i32>} : memref<1x256x128xbf16, #tpu.memory_space<vmem>>, vector<1x256x128xbf16>,
    return
  }
  func.func @transform_0(%arg0: i32, %arg1: i32) -> (i32, i32, i32) {
    %c0_i32 = arith.constant 0 : i32
    %c0_i32_0 = arith.constant 0 : i32
    %c0_i32_1 = arith.constant 0 : i32
    return %arg0, %c0_i32, %c0_i32_0 : i32, i32, i32
  }
  func.func @transform_1(%arg0: i32, %arg1: i32) -> (i32, i32) {
    %c0_i32 = arith.constant 0 : i32
    %c0_i32_0 = arith.constant 0 : i32
    return %c0_i32, %arg1 : i32, i32
  }
  func.func @transform_2(%arg0: i32, %arg1: i32) -> (i32, i32) {
    %c0_i32 = arith.constant 0 : i32
    %c0_i32_0 = arith.constant 0 : i32
    return %c0_i32, %arg1 : i32, i32
  }
  func.func @transform_3(%arg0: i32, %arg1: i32) -> (i32, i32) {
    %c0_i32 = arith.constant 0 : i32
    %c0_i32_0 = arith.constant 0 : i32
    return %c0_i32, %arg1 : i32, i32
  }
  func.func @transform_4(%arg0: i32, %arg1: i32) -> (i32, i32, i32) {
    %c0_i32 = arith.constant 0 : i32
    %c0_i32_0 = arith.constant 0 : i32
    return %arg0, %c0_i32, %arg1 : i32, i32, i32
  }
}

</mosaic_0001>

<llo_original>
// kernel: conv_dropout_norm_relu.1
$region0: #{conv_dropout_norm_relu.1}
  #allocation0 [shape = 'u32[]', space=smem, size = 0x4, offset = 0x4, fixed_abs, tag = 'smem constant byte address 0x4 - core index']
  #allocation1 [shape = 'u32[144,128]{1,0:T(1,128)}', space=vmem, size = 0x12000, scoped, tag = 'internal scratch']
  %s0 = inlined_call_operand.vmem [shape: bf16[2,256,48], index: 0, kind: input, shape index: {}]
  %s1 = inlined_call_operand.vmem [shape: bf16[48,128], index: 1, kind: input, shape index: {}]
  %s2 = inlined_call_operand.vmem [shape: f32[1,128], index: 2, kind: input, shape index: {}]
  %s3 = inlined_call_operand.vmem [shape: f32[1,128], index: 3, kind: input, shape index: {}]
  %s4 = inlined_call_operand.vmem [shape: bf16[2,256,128], index: 4, kind: output, shape index: {}]
  %s5 = sld [smem:[#allocation0]]
  $region49: #{conv_dropout_norm_relu.1} parent=0
    _
  %s7 = ssub.s32 1, %s5
  %s8 = scalar_select 0, %s7, %s5
  loop: start=0, step=1, limit=4
  $region2: #{conv_dropout_norm_relu.1} parent=0 // loop_pre_header
    _
  $region3: #{conv_dropout_norm_relu.1} parent=0 // loop_header
    %s10 = sphi 0, %s14
    %p11 = scmp.ge.s32.totalorder %s10, 4
    %s17 = sphi 0, %s29
    %s18 = sphi 0, %s25
    %s19 = sphi 0, %s17
    %s20 = sphi 0, %s18
    %s21 = sphi 0, %s19
    %s22 = sphi 0, %s20
    %s32 = sphi 0, %s34
    %s35 = sphi 0, %s32
    %s36 = sphi 0, %s35
    %s52 = sphi 0, %s36
    %s58 = sphi 0, %s60
    %s61 = sphi 0, %s58
    %s62 = sphi 0, %s61
    %s78 = sphi 0, %s62
    %s84 = sphi 0, %s86
    %s87 = sphi 0, %s84
    %s88 = sphi 0, %s87
    %s104 = sphi 0, %s88
    %s110 = sphi 0, %s112
    %s113 = sphi 0, %s110
    %s114 = sphi 0, %s113
    %s130 = sphi 0, %s114
    %s138 = sphi 0, %s140
    %s141 = sphi 0, %s138
    %s142 = sphi 0, %s141
    %s158 = sphi 0, %s142
  $region4: #{conv_dropout_norm_relu.1} parent=0 // loop_header_branch
    %13 = sbr.rel (%p11) target = $region8
  $region5: #{conv_dropout_norm_relu.1} parent=0 // loop_body
    %s15 = ssub.s32 %s10, 1
    %s16 = ssub.s32 %s10, 2
    %s23 = sadd.s32 1, %s18
    %p24 = scmp.ge.s32.totalorder %s23, 1
    %s25 = scalar_select %p24, 0, %s23
    %s26 = sadd.s32 1, %s17
    %s27 = scalar_select %p24, %s26, %s17
    %p28 = scmp.ge.s32.totalorder %s27, 2
    %s29 = scalar_select %p28, 0, %s27
    %s30 = ssub.s32 %s17, %s29
    %p31 = scmp.eq.s32.totalorder %s30, 0
    %s33 = sadd.s32 %s32, 1
    %s34 = scalar_select %p31, %s32, %s33
    %p37 = pneg %p31
    %p38 = scmp.eq.s32.totalorder %s10, 1
    %p39 = por %p37, %p38
    %p40 = scmp.ne.s32.totalorder %s32, %s35
    %p41 = scmp.eq.s32.totalorder %s10, 0
    %p42 = por %p40, %p41
    %p43 = scmp.ne.s32.totalorder %s32, %s35
    %p44 = scmp.eq.s32.totalorder %s15, 1
    %p45 = por %p43, %p44
    %p46 = scmp.ne.s32.totalorder %s35, %s36
    %p47 = scmp.eq.s32.totalorder %s15, 0
    %p48 = por %p46, %p47
    %p49 = scmp.ne.s32.totalorder %s35, %s36
    %p50 = scmp.eq.s32.totalorder %s16, 1
    %p51 = por %p49, %p50
    %p53 = scmp.ne.s32.totalorder %s36, %s52
    %p54 = scmp.eq.s32.totalorder %s16, 0
    %p55 = por %p53, %p54
    %s56 = ssub.s32 %s18, %s25
    %p57 = scmp.eq.s32.totalorder %s56, 0
    %s59 = sadd.s32 %s58, 1
    %s60 = scalar_select %p57, %s58, %s59
    %p63 = pneg %p57
    %p64 = scmp.eq.s32.totalorder %s10, 1
    %p65 = por %p63, %p64
    %p66 = scmp.ne.s32.totalorder %s58, %s61
    %p67 = scmp.eq.s32.totalorder %s10, 0
    %p68 = por %p66, %p67
    %p69 = scmp.ne.s32.totalorder %s58, %s61
    %p70 = scmp.eq.s32.totalorder %s15, 1
    %p71 = por %p69, %p70
    %p72 = scmp.ne.s32.totalorder %s61, %s62
    %p73 = scmp.eq.s32.totalorder %s15, 0
    %p74 = por %p72, %p73
    %p75 = scmp.ne.s32.totalorder %s61, %s62
    %p76 = scmp.eq.s32.totalorder %s16, 1
    %p77 = por %p75, %p76
    %p79 = scmp.ne.s32.totalorder %s62, %s78
    %p80 = scmp.eq.s32.totalorder %s16, 0
    %p81 = por %p79, %p80
    %s82 = ssub.s32 %s18, %s25
    %p83 = scmp.eq.s32.totalorder %s82, 0
    %s85 = sadd.s32 %s84, 1
    %s86 = scalar_select %p83, %s84, %s85
    %p89 = pneg %p83
    %p90 = scmp.eq.s32.totalorder %s10, 1
    %p91 = por %p89, %p90
    %p92 = scmp.ne.s32.totalorder %s84, %s87
    %p93 = scmp.eq.s32.totalorder %s10, 0
    %p94 = por %p92, %p93
    %p95 = scmp.ne.s32.totalorder %s84, %s87
    %p96 = scmp.eq.s32.totalorder %s15, 1
    %p97 = por %p95, %p96
    %p98 = scmp.ne.s32.totalorder %s87, %s88
    %p99 = scmp.eq.s32.totalorder %s15, 0
    %p100 = por %p98, %p99
    %p101 = scmp.ne.s32.totalorder %s87, %s88
    %p102 = scmp.eq.s32.totalorder %s16, 1
    %p103 = por %p101, %p102
    %p105 = scmp.ne.s32.totalorder %s88, %s104
    %p106 = scmp.eq.s32.totalorder %s16, 0
    %p107 = por %p105, %p106
    %s108 = ssub.s32 %s18, %s25
    %p109 = scmp.eq.s32.totalorder %s108, 0
    %s111 = sadd.s32 %s110, 1
    %s112 = scalar_select %p109, %s110, %s111
    %p115 = pneg %p109
    %p116 = scmp.eq.s32.totalorder %s10, 1
    %p117 = por %p115, %p116
    %p118 = scmp.ne.s32.totalorder %s110, %s113
    %p119 = scmp.eq.s32.totalorder %s10, 0
    %p120 = por %p118, %p119
    %p121 = scmp.ne.s32.totalorder %s110, %s113
    %p122 = scmp.eq.s32.totalorder %s15, 1
    %p123 = por %p121, %p122
    %p124 = scmp.ne.s32.totalorder %s113, %s114
    %p125 = scmp.eq.s32.totalorder %s15, 0
    %p126 = por %p124, %p125
    %p127 = scmp.ne.s32.totalorder %s113, %s114
    %p128 = scmp.eq.s32.totalorder %s16, 1
    %p129 = por %p127, %p128
    %p131 = scmp.ne.s32.totalorder %s114, %s130
    %p132 = scmp.eq.s32.totalorder %s16, 0
    %p133 = por %p131, %p132
    %s134 = ssub.s32 %s17, %s29
    %s135 = ssub.s32 %s18, %s25
    %s136 = sor.u32 %s134, %s135
    %p137 = scmp.eq.s32.totalorder %s136, 0
    %s139 = sadd.s32 %s138, 1
    %s140 = scalar_select %p137, %s138, %s139
    %p143 = pneg %p137
    %p144 = scmp.eq.s32.totalorder %s10, 1
    %p145 = por %p143, %p144
    %p146 = scmp.ne.s32.totalorder %s138, %s141
    %p147 = scmp.eq.s32.totalorder %s10, 0
    %p148 = por %p146, %p147
    %p149 = scmp.ne.s32.totalorder %s138, %s141
    %p150 = scmp.eq.s32.totalorder %s15, 1
    %p151 = por %p149, %p150
    %p152 = scmp.ne.s32.totalorder %s141, %s142
    %p153 = scmp.eq.s32.totalorder %s15, 0
    %p154 = por %p152, %p153
    %p155 = scmp.ne.s32.totalorder %s141, %s142
    %p156 = scmp.eq.s32.totalorder %s16, 1
    %p157 = por %p155, %p156
    %p159 = scmp.ne.s32.totalorder %s142, %s158
    %p160 = scmp.eq.s32.totalorder %s16, 0
    %p161 = por %p159, %p160
    %p162 = scmp.le.s32.totalorder 1, %s10
    %p163 = scmp.lt.s32.totalorder %s10, 3
    %p164 = pnand %p162, %p163
    %p165 = pneg %p164
    // Predicated region
    $region9: #{conv_dropout_norm_relu.1} parent=5 // pred_check
      _
    $region10: #{conv_dropout_norm_relu.1} parent=5 // pred_check_branch
      %167 = sbr.rel (%p164) target = $region12
    $region11: #{conv_dropout_norm_relu.1} parent=5 // pred_region
      %s168 = ssub.s32 %s10, 1
      // Predicated region
      $region13: #{conv_dropout_norm_relu.1} parent=11 // pred_check
        %p169 = pneg %p74
      $region14: #{conv_dropout_norm_relu.1} parent=11 // pred_check_branch
        %171 = sbr.rel (%p169) target = $region16
      $region15: #{conv_dropout_norm_relu.1} parent=11 // pred_region
        %p172 = scmp.lt.s32.totalorder %s20, 0
        %s173 = scalar_select %p172, %s20, 0
        %s174 = smul.addr %s173, 4
        %s175 = scalar_lea.vmem %s1, %s174
      $region16: #{conv_dropout_norm_relu.1} parent=11 // pred_fallthru
        _
      // Predicated region
      $region17: #{conv_dropout_norm_relu.1} parent=11 // pred_check
        %p176 = pneg %p100
      $region18: #{conv_dropout_norm_relu.1} parent=11 // pred_check_branch
        %178 = sbr.rel (%p176) target = $region20
      $region19: #{conv_dropout_norm_relu.1} parent=11 // pred_region
        %p179 = scmp.lt.s32.totalorder %s20, 0
        %s180 = scalar_select %p179, %s20, 0
        %s181 = scalar_lea.vmem %s2, %s180
      $region20: #{conv_dropout_norm_relu.1} parent=11 // pred_fallthru
        _
      // Predicated region
      $region21: #{conv_dropout_norm_relu.1} parent=11 // pred_check
        %p182 = pneg %p126
      $region22: #{conv_dropout_norm_relu.1} parent=11 // pred_check_branch
        %184 = sbr.rel (%p182) target = $region24
      $region23: #{conv_dropout_norm_relu.1} parent=11 // pred_region
        %p185 = scmp.lt.s32.totalorder %s20, 0
        %s186 = scalar_select %p185, %s20, 0
        %s187 = scalar_lea.vmem %s3, %s186
      $region24: #{conv_dropout_norm_relu.1} parent=11 // pred_fallthru
        _
    $region12: #{conv_dropout_norm_relu.1} parent=5 // pred_fallthru
      _
    %p188 = scmp.lt.s32.totalorder %s10, 2
    // Predicated region
    $region25: #{conv_dropout_norm_relu.1} parent=5 // pred_check
      %p189 = pneg %p188
    $region26: #{conv_dropout_norm_relu.1} parent=5 // pred_check_branch
      %191 = sbr.rel (%p189) target = $region28
    $region27: #{conv_dropout_norm_relu.1} parent=5 // pred_region
      // Predicated region
      $region29: #{conv_dropout_norm_relu.1} parent=27 // pred_check
        %p192 = pneg %p42
      $region30: #{conv_dropout_norm_relu.1} parent=27 // pred_check_branch
        %194 = sbr.rel (%p192) target = $region32
      $region31: #{conv_dropout_norm_relu.1} parent=27 // pred_region
        %p195 = scmp.lt.s32.totalorder %s17, 1
        %s196 = scalar_select %p195, %s17, 1
        %s197 = smul.addr %s196, 32
        %s198 = smul.addr %s197, 4
        %s199 = scalar_lea.vmem %s0, %s198
      $region32: #{conv_dropout_norm_relu.1} parent=27 // pred_fallthru
        _
    $region28: #{conv_dropout_norm_relu.1} parent=5 // pred_fallthru
      _
    %p200 = scmp.le.s32.totalorder 1, %s10
    %p201 = scmp.lt.s32.totalorder %s10, 3
    %p202 = pnand %p200, %p201
    %p203 = pneg %p202
    // Predicated region
    $region33: #{conv_dropout_norm_relu.1} parent=5 // pred_check
      _
    $region34: #{conv_dropout_norm_relu.1} parent=5 // pred_check_branch
      %205 = sbr.rel (%p202) target = $region36
    $region35: #{conv_dropout_norm_relu.1} parent=5 // pred_region
      %s206 = ssub.s32 %s10, 1
      %p207 = scmp.lt.s32.totalorder %s19, 1
      %s208 = scalar_select %p207, %s19, 1
      %s209 = smul.addr %s208, 32
      %s210 = smul.addr %s209, 4
      %s211 = scalar_lea.vmem %s0, %s210
      %p212 = pneg %p48
      %p213 = pneg %p45
      %p214 = scmp.lt.s32.totalorder %s20, 0
      %s215 = scalar_select %p214, %s20, 0
      %s216 = smul.addr %s215, 4
      %s217 = scalar_lea.vmem %s1, %s216
      %p218 = pneg %p74
      %p219 = pneg %p71
      %p220 = scmp.lt.s32.totalorder %s20, 0
      %s221 = scalar_select %p220, %s20, 0
      %s222 = scalar_lea.vmem %s2, %s221
      %p223 = pneg %p100
      %p224 = pneg %p97
      %p225 = scmp.lt.s32.totalorder %s20, 0
      %s226 = scalar_select %p225, %s20, 0
      %s227 = scalar_lea.vmem %s3, %s226
      %p228 = pneg %p126
      %p229 = pneg %p123
      %p230 = pneg %p154
      %p231 = pneg %p151
      %p232 = scmp.lt.s32.totalorder %s19, 1
      %s233 = scalar_select %p232, %s19, 1
      %p234 = scmp.lt.s32.totalorder %s20, 0
      %s235 = scalar_select %p234, %s20, 0
      %s236 = smul.addr %s233, 32
      %s237 = sadd.s32 %s235, %s236
      %s238 = smul.addr %s237, 4
      %s239 = scalar_lea.vmem %s4, %s238
      %p240 = scmp.lt.s32.totalorder %s19, 1
      %s241 = scalar_select %p240, %s19, 1
      %s242 = smul.addr %s241, 32
      %s243 = smul.addr %s242, 4
      %s244 = scalar_lea.vmem %s0, %s243
      %p245 = scmp.lt.s32.totalorder %s20, 0
      %s246 = scalar_select %p245, %s20, 0
      %s247 = smul.addr %s246, 4
      %s248 = scalar_lea.vmem %s1, %s247
      %p249 = scmp.lt.s32.totalorder %s20, 0
      %s250 = scalar_select %p249, %s20, 0
      %s251 = scalar_lea.vmem %s2, %s250
      %p252 = scmp.lt.s32.totalorder %s20, 0
      %s253 = scalar_select %p252, %s20, 0
      %s254 = scalar_lea.vmem %s3, %s253
      %p255 = scmp.lt.s32.totalorder %s19, 1
      %s256 = scalar_select %p255, %s19, 1
      %p257 = scmp.lt.s32.totalorder %s20, 0
      %s258 = scalar_select %p257, %s20, 0
      %s259 = smul.addr %s256, 32
      %s260 = sadd.s32 %s258, %s259
      %s261 = smul.addr %s260, 4
      %s262 = scalar_lea.vmem %s4, %s261
      %v264 = vld [vmem:[%s244] sm:$0xf]
      %v265 = vld [vmem:[%s244 + $0x4] sm:$0xf]
      %v266 = vld [vmem:[%s244 + $0x8] sm:$0xf]
      %v267 = vld [vmem:[%s244 + $0xc] sm:$0xf]
      %v268 = vld [vmem:[%s244 + $0x10] sm:$0xf]
      %v269 = vld [vmem:[%s244 + $0x14] sm:$0xf]
      %v270 = vld [vmem:[%s244 + $0x18] sm:$0xf]
      %v271 = vld [vmem:[%s244 + $0x1c] sm:$0xf]
      %v272 = vld [vmem:[%s244 + $0x20] sm:$0xf]
      %v273 = vld [vmem:[%s244 + $0x24] sm:$0xf]
      %v274 = vld [vmem:[%s244 + $0x28] sm:$0xf]
      %v275 = vld [vmem:[%s244 + $0x2c] sm:$0xf]
      %v276 = vld [vmem:[%s244 + $0x30] sm:$0xf]
      %v277 = vld [vmem:[%s244 + $0x34] sm:$0xf]
      %v278 = vld [vmem:[%s244 + $0x38] sm:$0xf]
      %v279 = vld [vmem:[%s244 + $0x3c] sm:$0xf]
      %v280 = vld [vmem:[%s244 + $0x40] sm:$0xf]
      %v281 = vld [vmem:[%s244 + $0x44] sm:$0xf]
      %v282 = vld [vmem:[%s244 + $0x48] sm:$0xf]
      %v283 = vld [vmem:[%s244 + $0x4c] sm:$0xf]
      %v284 = vld [vmem:[%s244 + $0x50] sm:$0xf]
      %v285 = vld [vmem:[%s244 + $0x54] sm:$0xf]
      %v286 = vld [vmem:[%s244 + $0x58] sm:$0xf]
      %v287 = vld [vmem:[%s244 + $0x5c] sm:$0xf]
      %v288 = vld [vmem:[%s244 + $0x60] sm:$0xf]
      %v289 = vld [vmem:[%s244 + $0x64] sm:$0xf]
      %v290 = vld [vmem:[%s244 + $0x68] sm:$0xf]
      %v291 = vld [vmem:[%s244 + $0x6c] sm:$0xf]
      %v292 = vld [vmem:[%s244 + $0x70] sm:$0xf]
      %v293 = vld [vmem:[%s244 + $0x74] sm:$0xf]
      %v294 = vld [vmem:[%s244 + $0x78] sm:$0xf]
      %v295 = vld [vmem:[%s244 + $0x7c] sm:$0xf]
      %v296 = vld [vmem:[%s248] sm:$0xf]
      %v297 = vld [vmem:[%s248 + $0x4] sm:$0xf]
      %v298 = vld [vmem:[%s248 + $0x8] sm:$0xf]
      %v299 = vld [vmem:[%s248 + $0xc] sm:$0xf]
      %v300 = vld [vmem:[%s248 + $0x10] sm:$0xf]
      %v301 = vld [vmem:[%s248 + $0x14] sm:$0xf]
      %v334 = vunpack.c.l.b16 %v264
      %v335 = vunpack.c.l.b16 %v265
      %v336 = vunpack.c.l.b16 %v266
      %v337 = vunpack.c.l.b16 %v267
      %v338 = vunpack.c.l.b16 %v268
      %v339 = vunpack.c.l.b16 %v269
      %v340 = vunpack.c.l.b16 %v270
      %v341 = vunpack.c.l.b16 %v271
      %v342 = vunpack.c.l.b16 %v272
      %v343 = vunpack.c.l.b16 %v273
      %v344 = vunpack.c.l.b16 %v274
      %v345 = vunpack.c.l.b16 %v275
      %v346 = vunpack.c.l.b16 %v276
      %v347 = vunpack.c.l.b16 %v277
      %v348 = vunpack.c.l.b16 %v278
      %v349 = vunpack.c.l.b16 %v279
      %v350 = vunpack.c.l.b16 %v280
      %v351 = vunpack.c.l.b16 %v281
      %v352 = vunpack.c.l.b16 %v282
      %v353 = vunpack.c.l.b16 %v283
      %v354 = vunpack.c.l.b16 %v284
      %v355 = vunpack.c.l.b16 %v285
      %v356 = vunpack.c.l.b16 %v286
      %v357 = vunpack.c.l.b16 %v287
      %v358 = vunpack.c.l.b16 %v288
      %v359 = vunpack.c.l.b16 %v289
      %v360 = vunpack.c.l.b16 %v290
      %v361 = vunpack.c.l.b16 %v291
      %v362 = vunpack.c.l.b16 %v292
      %v363 = vunpack.c.l.b16 %v293
      %v364 = vunpack.c.l.b16 %v294
      %v365 = vunpack.c.l.b16 %v295
      %v366 = vpack.c.b16 %v335, %v334
      %v367 = vpack.c.b16 %v337, %v336
      %v368 = vpack.c.b16 %v339, %v338
      %v369 = vpack.c.b16 %v341, %v340
      %v370 = vpack.c.b16 %v343, %v342
      %v371 = vpack.c.b16 %v345, %v344
      %v372 = vpack.c.b16 %v347, %v346
      %v373 = vpack.c.b16 %v349, %v348
      %v374 = vpack.c.b16 %v351, %v350
      %v375 = vpack.c.b16 %v353, %v352
      %v376 = vpack.c.b16 %v355, %v354
      %v377 = vpack.c.b16 %v357, %v356
      %v378 = vpack.c.b16 %v359, %v358
      %v379 = vpack.c.b16 %v361, %v360
      %v380 = vpack.c.b16 %v363, %v362
      %v381 = vpack.c.b16 %v365, %v364
      %v388 = vunpack.c.l.b16 %v296
      %v389 = vunpack.c.l.b16 %v297
      %v390 = vunpack.c.l.b16 %v298
      %v391 = vunpack.c.l.b16 %v299
      %v392 = vunpack.c.l.b16 %v300
      %v393 = vunpack.c.l.b16 %v301
      %v394 = vpack.c.b16 %v389, %v388
      %v395 = vpack.c.b16 %v391, %v390
      %v396 = vpack.c.b16 %v393, %v392
      %vm400 = vcmask 392192
      %v402 = vsel %vm400, %v366, 0
      %v405 = vsel %vm400, %v367, 0
      %v408 = vsel %vm400, %v368, 0
      %v411 = vsel %vm400, %v369, 0
      %v414 = vsel %vm400, %v370, 0
      %v417 = vsel %vm400, %v371, 0
      %v420 = vsel %vm400, %v372, 0
      %v423 = vsel %vm400, %v373, 0
      %v426 = vsel %vm400, %v374, 0
      %v429 = vsel %vm400, %v375, 0
      %v432 = vsel %vm400, %v376, 0
      %v435 = vsel %vm400, %v377, 0
      %v438 = vsel %vm400, %v378, 0
      %v441 = vsel %vm400, %v379, 0
      %v444 = vsel %vm400, %v380, 0
      %v447 = vsel %vm400, %v381, 0
      %449 = vmatprep.subr.bf16.mxu0 0
      %450 = vmatpush1.bf16.msra.mxu0 0
      %451 = vmatprep.subr.bf16.mxu0 0
      %452 = vmatpush1.bf16.msra.mxu0 0
      %453 = vmatprep.subr.bf16.mxu0 0
      %454 = vmatpush1.bf16.msra.mxu0 0
      %455 = vmatprep.subr.bf16.mxu0 0
      %456 = vmatpush1.bf16.msra.mxu0 0
      %457 = vmatprep.subr.bf16.mxu0 0
      %458 = vmatpush1.bf16.msra.mxu0 0
      %459 = vmatprep.subr.bf16.mxu0 0
      %460 = vmatpush1.bf16.msra.mxu0 %v396
      %461 = vmatprep.subr.bf16.mxu0 0
      %462 = vmatpush1.bf16.msra.mxu0 %v395
      %463 = vmatprep.subr.bf16.mxu0 0
      %464 = vmatpush1.bf16.msra.mxu0 %v394
      %465 = vmatprep.subr.bf16.mxu0 0
      %466 = vmatpush2.bf16.msra.mxu0 0
      %467 = vmatprep.subr.bf16.mxu0 0
      %468 = vmatpush2.bf16.msra.mxu0 0
      %469 = vmatprep.subr.bf16.mxu0 0
      %470 = vmatpush2.bf16.msra.mxu0 0
      %471 = vmatprep.subr.bf16.mxu0 0
      %472 = vmatpush2.bf16.msra.mxu0 0
      %473 = vmatprep.subr.bf16.mxu0 0
      %474 = vmatpush2.bf16.msra.mxu0 0
      %475 = vmatprep.subr.bf16.mxu0 0
      %476 = vmatpush2.bf16.msra.mxu0 0
      %477 = vmatprep.subr.bf16.mxu0 0
      %478 = vmatpush2.bf16.msra.mxu0 0
      %479 = vmatprep.subr.bf16.mxu0 0
      %480 = vmatpush2.bf16.msra.mxu0 0
      %481 = vmatprep.mubr.bf16.mxu0 0
      %482 = vmatmul.mubr.bf16.gmra.mxu0 %v402
      %v483 = vpop.f32.mrf.mxu0
      %v484 = vadd.f32 0.0, %v483
      %v485 = vpop.f32.mrf.mxu0
      %v486 = vpop.f32.mrf.mxu0
      %v487 = vadd.f32 0.0, %v486
      %v488 = vpop.f32.mrf.mxu0
      %489 = vmatprep.mubr.bf16.mxu0 0
      %490 = vmatmul.mubr.bf16.gmra.mxu0 %v405
      %v491 = vpop.f32.mrf.mxu0
      %v492 = vadd.f32 0.0, %v491
      %v493 = vpop.f32.mrf.mxu0
      %v494 = vpop.f32.mrf.mxu0
      %v495 = vadd.f32 0.0, %v494
      %v496 = vpop.f32.mrf.mxu0
      %497 = vmatprep.mubr.bf16.mxu0 0
      %498 = vmatmul.mubr.bf16.gmra.mxu0 %v408
      %v499 = vpop.f32.mrf.mxu0
      %v500 = vadd.f32 0.0, %v499
      %v501 = vpop.f32.mrf.mxu0
      %v502 = vpop.f32.mrf.mxu0
      %v503 = vadd.f32 0.0, %v502
      %v504 = vpop.f32.mrf.mxu0
      %505 = vmatprep.mubr.bf16.mxu0 0
      %506 = vmatmul.mubr.bf16.gmra.mxu0 %v411
      %v507 = vpop.f32.mrf.mxu0
      %v508 = vadd.f32 0.0, %v507
      %v509 = vpop.f32.mrf.mxu0
      %v510 = vpop.f32.mrf.mxu0
      %v511 = vadd.f32 0.0, %v510
      %v512 = vpop.f32.mrf.mxu0
      %513 = vmatprep.mubr.bf16.mxu0 0
      %514 = vmatmul.mubr.bf16.gmra.mxu0 %v414
      %v515 = vpop.f32.mrf.mxu0
      %v516 = vadd.f32 0.0, %v515
      %v517 = vpop.f32.mrf.mxu0
      %v518 = vpop.f32.mrf.mxu0
      %v519 = vadd.f32 0.0, %v518
      %v520 = vpop.f32.mrf.mxu0
      %521 = vmatprep.mubr.bf16.mxu0 0
      %522 = vmatmul.mubr.bf16.gmra.mxu0 %v417
      %v523 = vpop.f32.mrf.mxu0
      %v524 = vadd.f32 0.0, %v523
      %v525 = vpop.f32.mrf.mxu0
      %v526 = vpop.f32.mrf.mxu0
      %v527 = vadd.f32 0.0, %v526
      %v528 = vpop.f32.mrf.mxu0
      %529 = vmatprep.mubr.bf16.mxu0 0
      %530 = vmatmul.mubr.bf16.gmra.mxu0 %v420
      %v531 = vpop.f32.mrf.mxu0
      %v532 = vadd.f32 0.0, %v531
      %v533 = vpop.f32.mrf.mxu0
      %v534 = vpop.f32.mrf.mxu0
      %v535 = vadd.f32 0.0, %v534
      %v536 = vpop.f32.mrf.mxu0
      %537 = vmatprep.mubr.bf16.mxu0 0
      %538 = vmatmul.mubr.bf16.gmra.mxu0 %v423
      %v539 = vpop.f32.mrf.mxu0
      %v540 = vadd.f32 0.0, %v539
      %v541 = vpop.f32.mrf.mxu0
      %v542 = vpop.f32.mrf.mxu0
      %v543 = vadd.f32 0.0, %v542
      %v544 = vpop.f32.mrf.mxu0
      %545 = vmatprep.mubr.bf16.mxu0 0
      %546 = vmatmul.mubr.bf16.gmra.mxu0 %v426
      %v547 = vpop.f32.mrf.mxu0
      %v548 = vadd.f32 0.0, %v547
      %v549 = vpop.f32.mrf.mxu0
      %v550 = vpop.f32.mrf.mxu0
      %v551 = vadd.f32 0.0, %v550
      %v552 = vpop.f32.mrf.mxu0
      %553 = vmatprep.mubr.bf16.mxu0 0
      %554 = vmatmul.mubr.bf16.gmra.mxu0 %v429
      %v555 = vpop.f32.mrf.mxu0
      %v556 = vadd.f32 0.0, %v555
      %v557 = vpop.f32.mrf.mxu0
      %v558 = vpop.f32.mrf.mxu0
      %v559 = vadd.f32 0.0, %v558
      %v560 = vpop.f32.mrf.mxu0
      %561 = vmatprep.mubr.bf16.mxu0 0
      %562 = vmatmul.mubr.bf16.gmra.mxu0 %v432
      %v563 = vpop.f32.mrf.mxu0
      %v564 = vadd.f32 0.0, %v563
      %v565 = vpop.f32.mrf.mxu0
      %v566 = vpop.f32.mrf.mxu0
      %v567 = vadd.f32 0.0, %v566
      %v568 = vpop.f32.mrf.mxu0
      %569 = vmatprep.mubr.bf16.mxu0 0
      %570 = vmatmul.mubr.bf16.gmra.mxu0 %v435
      %v571 = vpop.f32.mrf.mxu0
      %v572 = vadd.f32 0.0, %v571
      %v573 = vpop.f32.mrf.mxu0
      %v574 = vpop.f32.mrf.mxu0
      %v575 = vadd.f32 0.0, %v574
      %v576 = vpop.f32.mrf.mxu0
      %577 = vmatprep.mubr.bf16.mxu0 0
      %578 = vmatmul.mubr.bf16.gmra.mxu0 %v438
      %v579 = vpop.f32.mrf.mxu0
      %v580 = vadd.f32 0.0, %v579
      %v581 = vpop.f32.mrf.mxu0
      %v582 = vpop.f32.mrf.mxu0
      %v583 = vadd.f32 0.0, %v582
      %v584 = vpop.f32.mrf.mxu0
      %585 = vmatprep.mubr.bf16.mxu0 0
      %586 = vmatmul.mubr.bf16.gmra.mxu0 %v441
      %v587 = vpop.f32.mrf.mxu0
      %v588 = vadd.f32 0.0, %v587
      %v589 = vpop.f32.mrf.mxu0
      %v590 = vpop.f32.mrf.mxu0
      %v591 = vadd.f32 0.0, %v590
      %v592 = vpop.f32.mrf.mxu0
      %593 = vmatprep.mubr.bf16.mxu0 0
      %594 = vmatmul.mubr.bf16.gmra.mxu0 %v444
      %v595 = vpop.f32.mrf.mxu0
      %v596 = vadd.f32 0.0, %v595
      %v597 = vpop.f32.mrf.mxu0
      %v598 = vpop.f32.mrf.mxu0
      %v599 = vadd.f32 0.0, %v598
      %v600 = vpop.f32.mrf.mxu0
      %601 = vmatprep.mubr.bf16.mxu0 0
      %602 = vmatmul.mubr.bf16.gmra.mxu0 %v447
      %v603 = vpop.f32.mrf.mxu0
      %v604 = vadd.f32 0.0, %v603
      %v605 = vpop.f32.mrf.mxu0
      %v606 = vpop.f32.mrf.mxu0
      %v607 = vadd.f32 0.0, %v606
      %v608 = vpop.f32.mrf.mxu0
      %609 = vdwg.mxu0
      %v610 = vadd.f32 %v484, %v487
      %v611 = vadd.f32 %v610, %v492
      %v612 = vadd.f32 %v611, %v495
      %v613 = vadd.f32 %v612, %v500
      %v614 = vadd.f32 %v613, %v503
      %v615 = vadd.f32 %v614, %v508
      %v616 = vadd.f32 %v615, %v511
      %v617 = vadd.f32 %v616, %v516
      %v618 = vadd.f32 %v617, %v519
      %v619 = vadd.f32 %v618, %v524
      %v620 = vadd.f32 %v619, %v527
      %v621 = vadd.f32 %v620, %v532
      %v622 = vadd.f32 %v621, %v535
      %v623 = vadd.f32 %v622, %v540
      %v624 = vadd.f32 %v623, %v543
      %v625 = vadd.f32 %v624, %v548
      %v626 = vadd.f32 %v625, %v551
      %v627 = vadd.f32 %v626, %v556
      %v628 = vadd.f32 %v627, %v559
      %v629 = vadd.f32 %v628, %v564
      %v630 = vadd.f32 %v629, %v567
      %v631 = vadd.f32 %v630, %v572
      %v632 = vadd.f32 %v631, %v575
      %v633 = vadd.f32 %v632, %v580
      %v634 = vadd.f32 %v633, %v583
      %v635 = vadd.f32 %v634, %v588
      %v636 = vadd.f32 %v635, %v591
      %v637 = vadd.f32 %v636, %v596
      %v638 = vadd.f32 %v637, %v599
      %v639 = vadd.f32 %v638, %v604
      %v640 = vadd.f32 %v639, %v607
      %v641 = vrot.slane %v640, 4
      %v642 = vadd.f32 %v640, %v641
      %v643 = vrot.slane %v642, 2
      %v644 = vadd.f32 %v642, %v643
      %v645 = vrot.slane %v644, 1
      %v646 = vadd.f32 %v644, %v645
      %v647 = vmul.f32 %v646, 0.00390625
      %v648 = vsub.f32 %v484, %v647
      %v649 = vsub.f32 %v487, %v647
      %v650 = vsub.f32 %v492, %v647
      %v651 = vsub.f32 %v495, %v647
      %v652 = vsub.f32 %v500, %v647
      %v653 = vsub.f32 %v503, %v647
      %v654 = vsub.f32 %v508, %v647
      %v655 = vsub.f32 %v511, %v647
      %v656 = vsub.f32 %v516, %v647
      %v657 = vsub.f32 %v519, %v647
      %v658 = vsub.f32 %v524, %v647
      %v659 = vsub.f32 %v527, %v647
      %v660 = vsub.f32 %v532, %v647
      %v661 = vsub.f32 %v535, %v647
      %v662 = vsub.f32 %v540, %v647
      %v663 = vsub.f32 %v543, %v647
      %v664 = vsub.f32 %v548, %v647
      %v665 = vsub.f32 %v551, %v647
      %v666 = vsub.f32 %v556, %v647
      %v667 = vsub.f32 %v559, %v647
      %v668 = vsub.f32 %v564, %v647
      %v669 = vsub.f32 %v567, %v647
      %v670 = vsub.f32 %v572, %v647
      %v671 = vsub.f32 %v575, %v647
      %v672 = vsub.f32 %v580, %v647
      %v673 = vsub.f32 %v583, %v647
      %v674 = vsub.f32 %v588, %v647
      %v675 = vsub.f32 %v591, %v647
      %v676 = vsub.f32 %v596, %v647
      %v677 = vsub.f32 %v599, %v647
      %v678 = vsub.f32 %v604, %v647
      %v679 = vsub.f32 %v607, %v647
      %v680 = vmul.f32 %v648, %v648
      %v681 = vmul.f32 %v649, %v649
      %v682 = vmul.f32 %v650, %v650
      %v683 = vmul.f32 %v651, %v651
      %v684 = vmul.f32 %v652, %v652
      %v685 = vmul.f32 %v653, %v653
      %v686 = vmul.f32 %v654, %v654
      %v687 = vmul.f32 %v655, %v655
      %v688 = vmul.f32 %v656, %v656
      %v689 = vmul.f32 %v657, %v657
      %v690 = vmul.f32 %v658, %v658
      %v691 = vmul.f32 %v659, %v659
      %v692 = vmul.f32 %v660, %v660
      %v693 = vmul.f32 %v661, %v661
      %v694 = vmul.f32 %v662, %v662
      %v695 = vmul.f32 %v663, %v663
      %v696 = vmul.f32 %v664, %v664
      %v697 = vmul.f32 %v665, %v665
      %v698 = vmul.f32 %v666, %v666
      %v699 = vmul.f32 %v667, %v667
      %v700 = vmul.f32 %v668, %v668
      %v701 = vmul.f32 %v669, %v669
      %v702 = vmul.f32 %v670, %v670
      %v703 = vmul.f32 %v671, %v671
      %v704 = vmul.f32 %v672, %v672
      %v705 = vmul.f32 %v673, %v673
      %v706 = vmul.f32 %v674, %v674
      %v707 = vmul.f32 %v675, %v675
      %v708 = vmul.f32 %v676, %v676
      %v709 = vmul.f32 %v677, %v677
      %v710 = vmul.f32 %v678, %v678
      %v711 = vmul.f32 %v679, %v679
      %v712 = vadd.f32 %v680, %v681
      %v713 = vadd.f32 %v712, %v682
      %v714 = vadd.f32 %v713, %v683
      %v715 = vadd.f32 %v714, %v684
      %v716 = vadd.f32 %v715, %v685
      %v717 = vadd.f32 %v716, %v686
      %v718 = vadd.f32 %v717, %v687
      %v719 = vadd.f32 %v718, %v688
      %v720 = vadd.f32 %v719, %v689
      %v721 = vadd.f32 %v720, %v690
      %v722 = vadd.f32 %v721, %v691
      %v723 = vadd.f32 %v722, %v692
      %v724 = vadd.f32 %v723, %v693
      %v725 = vadd.f32 %v724, %v694
      %v726 = vadd.f32 %v725, %v695
      %v727 = vadd.f32 %v726, %v696
      %v728 = vadd.f32 %v727, %v697
      %v729 = vadd.f32 %v728, %v698
      %v730 = vadd.f32 %v729, %v699
      %v731 = vadd.f32 %v730, %v700
      %v732 = vadd.f32 %v731, %v701
      %v733 = vadd.f32 %v732, %v702
      %v734 = vadd.f32 %v733, %v703
      %v735 = vadd.f32 %v734, %v704
      %v736 = vadd.f32 %v735, %v705
      %v737 = vadd.f32 %v736, %v706
      %v738 = vadd.f32 %v737, %v707
      %v739 = vadd.f32 %v738, %v708
      %v740 = vadd.f32 %v739, %v709
      %v741 = vadd.f32 %v740, %v710
      %v742 = vadd.f32 %v741, %v711
      %v743 = vrot.slane %v742, 4
      %v744 = vadd.f32 %v742, %v743
      %v745 = vrot.slane %v744, 2
      %v746 = vadd.f32 %v744, %v745
      %v747 = vrot.slane %v746, 1
      %v748 = vadd.f32 %v746, %v747
      %v749 = vmul.f32 %v748, 0.00390625
      %v750 = vmax.f32 %v749, 0.0
      %v751 = vadd.f32 %v750, 1e-05
      %v752 = vrsqrt.pop %v751
      %v753 = vld [vmem:[%s251] sm:$0x1]
      %v754 = vmul.f32 %v753, %v752
      %v755 = vld [vmem:[%s254] sm:$0x1]
      %v756 = vmul.f32 %v647, %v754
      %v757 = vsub.f32 %v755, %v756
      %v759 = vlaneseq
      %v760 = vshrl.u32 %v759, 7
      %v761 = vsub.s32 0, %v760
      %v762 = vrot.slane %v754, %v761
      %v764 = vmul.f32 %v484, %v762
      %v765 = vmul.f32 %v487, %v762
      %v766 = vmul.f32 %v492, %v762
      %v767 = vmul.f32 %v495, %v762
      %v768 = vmul.f32 %v500, %v762
      %v769 = vmul.f32 %v503, %v762
      %v770 = vmul.f32 %v508, %v762
      %v771 = vmul.f32 %v511, %v762
      %v772 = vmul.f32 %v516, %v762
      %v773 = vmul.f32 %v519, %v762
      %v774 = vmul.f32 %v524, %v762
      %v775 = vmul.f32 %v527, %v762
      %v776 = vmul.f32 %v532, %v762
      %v777 = vmul.f32 %v535, %v762
      %v778 = vmul.f32 %v540, %v762
      %v779 = vmul.f32 %v543, %v762
      %v780 = vmul.f32 %v548, %v762
      %v781 = vmul.f32 %v551, %v762
      %v782 = vmul.f32 %v556, %v762
      %v783 = vmul.f32 %v559, %v762
      %v784 = vmul.f32 %v564, %v762
      %v785 = vmul.f32 %v567, %v762
      %v786 = vmul.f32 %v572, %v762
      %v787 = vmul.f32 %v575, %v762
      %v788 = vmul.f32 %v580, %v762
      %v789 = vmul.f32 %v583, %v762
      %v790 = vmul.f32 %v588, %v762
      %v791 = vmul.f32 %v591, %v762
      %v792 = vmul.f32 %v596, %v762
      %v793 = vmul.f32 %v599, %v762
      %v794 = vmul.f32 %v604, %v762
      %v795 = vmul.f32 %v607, %v762
      %v797 = vlaneseq
      %v798 = vshrl.u32 %v797, 7
      %v799 = vsub.s32 0, %v798
      %v800 = vrot.slane %v757, %v799
      %v802 = vadd.f32 %v764, %v800
      %v803 = vadd.f32 %v765, %v800
      %v804 = vadd.f32 %v766, %v800
      %v805 = vadd.f32 %v767, %v800
      %v806 = vadd.f32 %v768, %v800
      %v807 = vadd.f32 %v769, %v800
      %v808 = vadd.f32 %v770, %v800
      %v809 = vadd.f32 %v771, %v800
      %v810 = vadd.f32 %v772, %v800
      %v811 = vadd.f32 %v773, %v800
      %v812 = vadd.f32 %v774, %v800
      %v813 = vadd.f32 %v775, %v800
      %v814 = vadd.f32 %v776, %v800
      %v815 = vadd.f32 %v777, %v800
      %v816 = vadd.f32 %v778, %v800
      %v817 = vadd.f32 %v779, %v800
      %v818 = vadd.f32 %v780, %v800
      %v819 = vadd.f32 %v781, %v800
      %v820 = vadd.f32 %v782, %v800
      %v821 = vadd.f32 %v783, %v800
      %v822 = vadd.f32 %v784, %v800
      %v823 = vadd.f32 %v785, %v800
      %v824 = vadd.f32 %v786, %v800
      %v825 = vadd.f32 %v787, %v800
      %v826 = vadd.f32 %v788, %v800
      %v827 = vadd.f32 %v789, %v800
      %v828 = vadd.f32 %v790, %v800
      %v829 = vadd.f32 %v791, %v800
      %v830 = vadd.f32 %v792, %v800
      %v831 = vadd.f32 %v793, %v800
      %v832 = vadd.f32 %v794, %v800
      %v833 = vadd.f32 %v795, %v800
      %vm834 = vcmp.ge.f32.partialorder %v802, 0.0
      %vm835 = vcmp.ge.f32.partialorder %v803, 0.0
      %vm836 = vcmp.ge.f32.partialorder %v804, 0.0
      %vm837 = vcmp.ge.f32.partialorder %v805, 0.0
      %vm838 = vcmp.ge.f32.partialorder %v806, 0.0
      %vm839 = vcmp.ge.f32.partialorder %v807, 0.0
      %vm840 = vcmp.ge.f32.partialorder %v808, 0.0
      %vm841 = vcmp.ge.f32.partialorder %v809, 0.0
      %vm842 = vcmp.ge.f32.partialorder %v810, 0.0
      %vm843 = vcmp.ge.f32.partialorder %v811, 0.0
      %vm844 = vcmp.ge.f32.partialorder %v812, 0.0
      %vm845 = vcmp.ge.f32.partialorder %v813, 0.0
      %vm846 = vcmp.ge.f32.partialorder %v814, 0.0
      %vm847 = vcmp.ge.f32.partialorder %v815, 0.0
      %vm848 = vcmp.ge.f32.partialorder %v816, 0.0
      %vm849 = vcmp.ge.f32.partialorder %v817, 0.0
      %vm850 = vcmp.ge.f32.partialorder %v818, 0.0
      %vm851 = vcmp.ge.f32.partialorder %v819, 0.0
      %vm852 = vcmp.ge.f32.partialorder %v820, 0.0
      %vm853 = vcmp.ge.f32.partialorder %v821, 0.0
      %vm854 = vcmp.ge.f32.partialorder %v822, 0.0
      %vm855 = vcmp.ge.f32.partialorder %v823, 0.0
      %vm856 = vcmp.ge.f32.partialorder %v824, 0.0
      %vm857 = vcmp.ge.f32.partialorder %v825, 0.0
      %vm858 = vcmp.ge.f32.partialorder %v826, 0.0
      %vm859 = vcmp.ge.f32.partialorder %v827, 0.0
      %vm860 = vcmp.ge.f32.partialorder %v828, 0.0
      %vm861 = vcmp.ge.f32.partialorder %v829, 0.0
      %vm862 = vcmp.ge.f32.partialorder %v830, 0.0
      %vm863 = vcmp.ge.f32.partialorder %v831, 0.0
      %vm864 = vcmp.ge.f32.partialorder %v832, 0.0
      %vm865 = vcmp.ge.f32.partialorder %v833, 0.0
      %v866 = vmul.f32 %v802, 0.01
      %v867 = vmul.f32 %v803, 0.01
      %v868 = vmul.f32 %v804, 0.01
      %v869 = vmul.f32 %v805, 0.01
      %v870 = vmul.f32 %v806, 0.01
      %v871 = vmul.f32 %v807, 0.01
      %v872 = vmul.f32 %v808, 0.01
      %v873 = vmul.f32 %v809, 0.01
      %v874 = vmul.f32 %v810, 0.01
      %v875 = vmul.f32 %v811, 0.01
      %v876 = vmul.f32 %v812, 0.01
      %v877 = vmul.f32 %v813, 0.01
      %v878 = vmul.f32 %v814, 0.01
      %v879 = vmul.f32 %v815, 0.01
      %v880 = vmul.f32 %v816, 0.01
      %v881 = vmul.f32 %v817, 0.01
      %v882 = vmul.f32 %v818, 0.01
      %v883 = vmul.f32 %v819, 0.01
      %v884 = vmul.f32 %v820, 0.01
      %v885 = vmul.f32 %v821, 0.01
      %v886 = vmul.f32 %v822, 0.01
      %v887 = vmul.f32 %v823, 0.01
      %v888 = vmul.f32 %v824, 0.01
      %v889 = vmul.f32 %v825, 0.01
      %v890 = vmul.f32 %v826, 0.01
      %v891 = vmul.f32 %v827, 0.01
      %v892 = vmul.f32 %v828, 0.01
      %v893 = vmul.f32 %v829, 0.01
      %v894 = vmul.f32 %v830, 0.01
      %v895 = vmul.f32 %v831, 0.01
      %v896 = vmul.f32 %v832, 0.01
      %v897 = vmul.f32 %v833, 0.01
      %v898 = vsel %vm834, %v802, %v866
      %v899 = vsel %vm835, %v803, %v867
      %v900 = vsel %vm836, %v804, %v868
      %v901 = vsel %vm837, %v805, %v869
      %v902 = vsel %vm838, %v806, %v870
      %v903 = vsel %vm839, %v807, %v871
      %v904 = vsel %vm840, %v808, %v872
      %v905 = vsel %vm841, %v809, %v873
      %v906 = vsel %vm842, %v810, %v874
      %v907 = vsel %vm843, %v811, %v875
      %v908 = vsel %vm844, %v812, %v876
      %v909 = vsel %vm845, %v813, %v877
      %v910 = vsel %vm846, %v814, %v878
      %v911 = vsel %vm847, %v815, %v879
      %v912 = vsel %vm848, %v816, %v880
      %v913 = vsel %vm849, %v817, %v881
      %v914 = vsel %vm850, %v818, %v882
      %v915 = vsel %vm851, %v819, %v883
      %v916 = vsel %vm852, %v820, %v884
      %v917 = vsel %vm853, %v821, %v885
      %v918 = vsel %vm854, %v822, %v886
      %v919 = vsel %vm855, %v823, %v887
      %v920 = vsel %vm856, %v824, %v888
      %v921 = vsel %vm857, %v825, %v889
      %v922 = vsel %vm858, %v826, %v890
      %v923 = vsel %vm859, %v827, %v891
      %v924 = vsel %vm860, %v828, %v892
      %v925 = vsel %vm861, %v829, %v893
      %v926 = vsel %vm862, %v830, %v894
      %v927 = vsel %vm863, %v831, %v895
      %v928 = vsel %vm864, %v832, %v896
      %v929 = vsel %vm865, %v833, %v897
      %v930 = vpack.c.bf16 %v899, %v898
      %v931 = vpack.c.bf16 %v901, %v900
      %v932 = vpack.c.bf16 %v903, %v902
      %v933 = vpack.c.bf16 %v905, %v904
      %v934 = vpack.c.bf16 %v907, %v906
      %v935 = vpack.c.bf16 %v909, %v908
      %v936 = vpack.c.bf16 %v911, %v910
      %v937 = vpack.c.bf16 %v913, %v912
      %v938 = vpack.c.bf16 %v915, %v914
      %v939 = vpack.c.bf16 %v917, %v916
      %v940 = vpack.c.bf16 %v919, %v918
      %v941 = vpack.c.bf16 %v921, %v920
      %v942 = vpack.c.bf16 %v923, %v922
      %v943 = vpack.c.bf16 %v925, %v924
      %v944 = vpack.c.bf16 %v927, %v926
      %v945 = vpack.c.bf16 %v929, %v928
      %v962 = vunpack.c.l.b16 %v930
      %v963 = vunpack.c.h.b16 %v930
      %v964 = vunpack.c.l.b16 %v931
      %v965 = vunpack.c.h.b16 %v931
      %v966 = vunpack.c.l.b16 %v932
      %v967 = vunpack.c.h.b16 %v932
      %v968 = vunpack.c.l.b16 %v933
      %v969 = vunpack.c.h.b16 %v933
      %v970 = vunpack.c.l.b16 %v934
      %v971 = vunpack.c.h.b16 %v934
      %v972 = vunpack.c.l.b16 %v935
      %v973 = vunpack.c.h.b16 %v935
      %v974 = vunpack.c.l.b16 %v936
      %v975 = vunpack.c.h.b16 %v936
      %v976 = vunpack.c.l.b16 %v937
      %v977 = vunpack.c.h.b16 %v937
      %v978 = vunpack.c.l.b16 %v938
      %v979 = vunpack.c.h.b16 %v938
      %v980 = vunpack.c.l.b16 %v939
      %v981 = vunpack.c.h.b16 %v939
      %v982 = vunpack.c.l.b16 %v940
      %v983 = vunpack.c.h.b16 %v940
      %v984 = vunpack.c.l.b16 %v941
      %v985 = vunpack.c.h.b16 %v941
      %v986 = vunpack.c.l.b16 %v942
      %v987 = vunpack.c.h.b16 %v942
      %v988 = vunpack.c.l.b16 %v943
      %v989 = vunpack.c.h.b16 %v943
      %v990 = vunpack.c.l.b16 %v944
      %v991 = vunpack.c.h.b16 %v944
      %v992 = vunpack.c.l.b16 %v945
      %v993 = vunpack.c.h.b16 %v945
      %v994 = vpack.c.b16 %v962, %v962
      %v995 = vpack.c.b16 %v963, %v963
      %v996 = vpack.c.b16 %v964, %v964
      %v997 = vpack.c.b16 %v965, %v965
      %v998 = vpack.c.b16 %v966, %v966
      %v999 = vpack.c.b16 %v967, %v967
      %v1000 = vpack.c.b16 %v968, %v968
      %v1001 = vpack.c.b16 %v969, %v969
      %v1002 = vpack.c.b16 %v970, %v970
      %v1003 = vpack.c.b16 %v971, %v971
      %v1004 = vpack.c.b16 %v972, %v972
      %v1005 = vpack.c.b16 %v973, %v973
      %v1006 = vpack.c.b16 %v974, %v974
      %v1007 = vpack.c.b16 %v975, %v975
      %v1008 = vpack.c.b16 %v976, %v976
      %v1009 = vpack.c.b16 %v977, %v977
      %v1010 = vpack.c.b16 %v978, %v978
      %v1011 = vpack.c.b16 %v979, %v979
      %v1012 = vpack.c.b16 %v980, %v980
      %v1013 = vpack.c.b16 %v981, %v981
      %v1014 = vpack.c.b16 %v982, %v982
      %v1015 = vpack.c.b16 %v983, %v983
      %v1016 = vpack.c.b16 %v984, %v984
      %v1017 = vpack.c.b16 %v985, %v985
      %v1018 = vpack.c.b16 %v986, %v986
      %v1019 = vpack.c.b16 %v987, %v987
      %v1020 = vpack.c.b16 %v988, %v988
      %v1021 = vpack.c.b16 %v989, %v989
      %v1022 = vpack.c.b16 %v990, %v990
      %v1023 = vpack.c.b16 %v991, %v991
      %v1024 = vpack.c.b16 %v992, %v992
      %v1025 = vpack.c.b16 %v993, %v993
      %1058 = vst [vmem:[%s262] sm:$0xf] %v994
      %1059 = vst [vmem:[%s262 + $0x4] sm:$0xf] %v995
      %1060 = vst [vmem:[%s262 + $0x8] sm:$0xf] %v996
      %1061 = vst [vmem:[%s262 + $0xc] sm:$0xf] %v997
      %1062 = vst [vmem:[%s262 + $0x10] sm:$0xf] %v998
      %1063 = vst [vmem:[%s262 + $0x14] sm:$0xf] %v999
      %1064 = vst [vmem:[%s262 + $0x18] sm:$0xf] %v1000
      %1065 = vst [vmem:[%s262 + $0x1c] sm:$0xf] %v1001
      %1066 = vst [vmem:[%s262 + $0x20] sm:$0xf] %v1002
      %1067 = vst [vmem:[%s262 + $0x24] sm:$0xf] %v1003
      %1068 = vst [vmem:[%s262 + $0x28] sm:$0xf] %v1004
      %1069 = vst [vmem:[%s262 + $0x2c] sm:$0xf] %v1005
      %1070 = vst [vmem:[%s262 + $0x30] sm:$0xf] %v1006
      %1071 = vst [vmem:[%s262 + $0x34] sm:$0xf] %v1007
      %1072 = vst [vmem:[%s262 + $0x38] sm:$0xf] %v1008
      %1073 = vst [vmem:[%s262 + $0x3c] sm:$0xf] %v1009
      %1074 = vst [vmem:[%s262 + $0x40] sm:$0xf] %v1010
      %1075 = vst [vmem:[%s262 + $0x44] sm:$0xf] %v1011
      %1076 = vst [vmem:[%s262 + $0x48] sm:$0xf] %v1012
      %1077 = vst [vmem:[%s262 + $0x4c] sm:$0xf] %v1013
      %1078 = vst [vmem:[%s262 + $0x50] sm:$0xf] %v1014
      %1079 = vst [vmem:[%s262 + $0x54] sm:$0xf] %v1015
      %1080 = vst [vmem:[%s262 + $0x58] sm:$0xf] %v1016
      %1081 = vst [vmem:[%s262 + $0x5c] sm:$0xf] %v1017
      %1082 = vst [vmem:[%s262 + $0x60] sm:$0xf] %v1018
      %1083 = vst [vmem:[%s262 + $0x64] sm:$0xf] %v1019
      %1084 = vst [vmem:[%s262 + $0x68] sm:$0xf] %v1020
      %1085 = vst [vmem:[%s262 + $0x6c] sm:$0xf] %v1021
      %1086 = vst [vmem:[%s262 + $0x70] sm:$0xf] %v1022
      %1087 = vst [vmem:[%s262 + $0x74] sm:$0xf] %v1023
      %1088 = vst [vmem:[%s262 + $0x78] sm:$0xf] %v1024
      %1089 = vst [vmem:[%s262 + $0x7c] sm:$0xf] %v1025
      %p1090 = scmp.lt.s32.totalorder %s19, 1
      %s1091 = scalar_select %p1090, %s19, 1
      %p1092 = scmp.lt.s32.totalorder %s20, 0
      %s1093 = scalar_select %p1092, %s20, 0
      %s1094 = smul.addr %s1091, 32
      %s1095 = sadd.s32 %s1093, %s1094
      %s1096 = smul.addr %s1095, 4
      %s1097 = scalar_lea.vmem %s4, %s1096
      // Predicated region
      $region37: #{conv_dropout_norm_relu.1} parent=35 // pred_check
        %p1098 = pneg %p151
      $region38: #{conv_dropout_norm_relu.1} parent=35 // pred_check_branch
        %1100 = sbr.rel (%p1098) target = $region40
      $region39: #{conv_dropout_norm_relu.1} parent=35 // pred_region
        _
      $region40: #{conv_dropout_norm_relu.1} parent=35 // pred_fallthru
        _
    $region36: #{conv_dropout_norm_relu.1} parent=5 // pred_fallthru
      _
    %p1101 = scmp.le.s32.totalorder 2, %s10
    // Predicated region
    $region41: #{conv_dropout_norm_relu.1} parent=5 // pred_check
      %p1102 = pneg %p1101
    $region42: #{conv_dropout_norm_relu.1} parent=5 // pred_check_branch
      %1104 = sbr.rel (%p1102) target = $region44
    $region43: #{conv_dropout_norm_relu.1} parent=5 // pred_region
      %s1105 = ssub.s32 %s10, 2
      // Predicated region
      $region45: #{conv_dropout_norm_relu.1} parent=43 // pred_check
        %p1106 = pneg %p157
      $region46: #{conv_dropout_norm_relu.1} parent=43 // pred_check_branch
        %1108 = sbr.rel (%p1106) target = $region48
      $region47: #{conv_dropout_norm_relu.1} parent=43 // pred_region
        %p1109 = scmp.lt.s32.totalorder %s21, 1
        %s1110 = scalar_select %p1109, %s21, 1
        %p1111 = scmp.lt.s32.totalorder %s22, 0
        %s1112 = scalar_select %p1111, %s22, 0
        %s1113 = smul.addr %s1110, 32
        %s1114 = sadd.s32 %s1112, %s1113
        %s1115 = smul.addr %s1114, 4
        %s1116 = scalar_lea.vmem %s4, %s1115
      $region48: #{conv_dropout_norm_relu.1} parent=43 // pred_fallthru
        _
    $region44: #{conv_dropout_norm_relu.1} parent=5 // pred_fallthru
      _
  $region6: #{conv_dropout_norm_relu.1} parent=0 // loop_footer
    %s14 = sadd.s32 1, %s10
  $region7: #{conv_dropout_norm_relu.1} parent=0 // loop_footer_branch
    %9 = sbr.rel target = $region3
  $region8: #{conv_dropout_norm_relu.1} parent=0 // loop_exit
    _

</llo_original>
